<compile_context>
chip_gen: v7x
topology: tpu7x:2x2x1
jax: 0.10.0
libtpu: 0.0.40
codegen_flags: <defaults>
</compile_context>

<pallas_src>
import jax
import jax.numpy as jnp
from jax.experimental import pallas as pl
from jax.experimental.pallas import tpu as pltpu


# ---------------------------------------------------------------------------
# Kernel
# ---------------------------------------------------------------------------
def critic_kernel(state_ref, action_ref, w1_ref, w2h_ref, w2a_ref, vec_ref, q_ref):
    eps = 1e-5
    second_pad = w2h_ref.shape[1]            # padded second_fc (static)

    state = state_ref[...].astype(jnp.bfloat16)
    action = action_ref[...].astype(jnp.bfloat16)

    # packed small vectors: row 0 gamma, 1 beta, 2 b2, 3 w3, 4 [b3, 0, ...]
    gamma = vec_ref[0:1, :]
    beta = vec_ref[1:2, :]
    b2 = vec_ref[2:3, :second_pad]
    w3 = vec_ref[3:4, :second_pad]
    b3 = vec_ref[4:5, 0:1]

    # fc_embedd: Linear (bias omitted -- cancelled exactly by the batch-mean
    # subtraction of training-mode BatchNorm) -> BatchNorm1d(batch stats) -> ReLU.
    z1 = jnp.dot(state, w1_ref[...], preferred_element_type=jnp.float32)
    mean = jnp.mean(z1, axis=0, keepdims=True)
    var = jnp.mean((z1 - mean) ** 2, axis=0, keepdims=True)     # biased batch var
    scale = gamma * jax.lax.rsqrt(var + eps)                    # EUP rsqrt, [1,F]
    shift = beta - mean * scale
    h1 = jnp.maximum(z1 * scale + shift, 0.0)                   # folded BN affine

    # fc_action_map[0]: Linear over concat([h1, action]) == h1 @ W2h + action @ W2a
    z2 = (jnp.dot(h1.astype(jnp.bfloat16), w2h_ref[...],
                  preferred_element_type=jnp.float32)
          + jnp.dot(action, w2a_ref[...], preferred_element_type=jnp.float32)
          + b2)
    h2 = jnp.maximum(z2, 0.0)

    # fc_action_map[2]: Linear(second_fc, 1) as VPU multiply + XLU lane reduce
    # (an N=1 MXU matmul would waste the systolic array and pay full drain latency).
    q_ref[...] = jnp.sum(h2 * w3, axis=-1, keepdims=True) + b3


# ---------------------------------------------------------------------------
# Host-side wrapper
# ---------------------------------------------------------------------------
def _round_up(n, m):
    return ((n + m - 1) // m) * m


def prep_kernel_inputs(params, first_fc, second_fc):
    """Pad feature dims to lane multiples, cast weights to bf16, pack small vectors."""
    first_pad = _round_up(first_fc, 128)      # 400 -> 512
    second_pad = _round_up(second_fc, 128)    # 300 -> 384

    w1 = jnp.pad(params["w1"], ((0, 0), (0, first_pad - first_fc))).astype(jnp.bfloat16)
    w2h = jnp.pad(params["w2h"], ((0, first_pad - first_fc),
                                  (0, second_pad - second_fc))).astype(jnp.bfloat16)
    w2a = jnp.pad(params["w2a"], ((0, 0), (0, second_pad - second_fc))).astype(jnp.bfloat16)

    # one [8, first_pad] f32 slab: gamma / beta / b2 / w3 / b3 (padded lanes are zero,
    # which keeps padded BN / layer-2 / layer-3 columns exactly zero).
    vec = jnp.zeros((8, first_pad), jnp.float32)
    vec = vec.at[0, :first_fc].set(params["gamma"][0])
    vec = vec.at[1, :first_fc].set(params["beta"][0])
    vec = vec.at[2, :second_fc].set(params["b2"][0])
    vec = vec.at[3, :second_fc].set(params["w3"][:, 0])
    vec = vec.at[4, 0].set(params["b3"][0, 0])
    return w1, w2h, w2a, vec


def critic_forward(state, action, w1, w2h, w2a, vec):
    B = state.shape[0]
    vmem = pl.BlockSpec(memory_space=pltpu.MemorySpace.VMEM)
    return pl.pallas_call(
        critic_kernel,
        out_shape=jax.ShapeDtypeStruct((B, 1), jnp.float32),
        in_specs=[vmem] * 6,
        out_specs=vmem,
    )(state, action, w1, w2h, w2a, vec)


# ---------------------------------------------------------------------------
# Parameter init (mirrors Critic.__init__ / reset_parameters shapes & limits)
# ---------------------------------------------------------------------------
def init_params(key, state_size, action_size, first_fc=400, second_fc=300):
    ks = jax.random.split(key, 8)
    lim1 = 1.0 / jnp.sqrt(float(first_fc))          # hidden_init(fc_embedd[0])
    lim2 = 1.0 / jnp.sqrt(float(second_fc))         # hidden_init(fc_action_map[0])
    lim_b1 = 1.0 / jnp.sqrt(float(state_size))
    lim_b2 = 1.0 / jnp.sqrt(float(first_fc + action_size))
    lim_b3 = 1.0 / jnp.sqrt(float(second_fc))

    w1 = jax.random.uniform(ks[0], (state_size, first_fc), jnp.float32, -lim1, lim1)
    b1 = jax.random.uniform(ks[1], (1, first_fc), jnp.float32, -lim_b1, lim_b1)
    gamma = jnp.ones((1, first_fc), jnp.float32)    # BatchNorm1d default weight
    beta = jnp.zeros((1, first_fc), jnp.float32)    # BatchNorm1d default bias

    w2_full = jax.random.uniform(ks[2], (first_fc + action_size, second_fc),
                                 jnp.float32, -lim2, lim2)
    w2h, w2a = w2_full[:first_fc], w2_full[first_fc:]
    b2 = jax.random.uniform(ks[3], (1, second_fc), jnp.float32, -lim_b2, lim_b2)

    w3 = jax.random.uniform(ks[4], (second_fc, 1), jnp.float32, -3e-3, 3e-3)
    b3 = jax.random.uniform(ks[5], (1, 1), jnp.float32, -lim_b3, lim_b3)

    return dict(w1=w1, b1=b1, gamma=gamma, beta=beta,
                w2h=w2h, w2a=w2a, b2=b2, w3=w3, b3=b3)


# ---------------------------------------------------------------------------
# References
# ---------------------------------------------------------------------------
def critic_reference_f32(state, action, params):
    """Module-faithful pure-f32 reference (includes b1; BN cancels it exactly)."""
    eps = 1e-5
    z1 = state @ params["w1"] + params["b1"]
    mean = jnp.mean(z1, axis=0, keepdims=True)
    var = jnp.mean((z1 - mean) ** 2, axis=0, keepdims=True)
    h1 = jnp.maximum((z1 - mean) / jnp.sqrt(var + eps) * params["gamma"]
                     + params["beta"], 0.0)
    z2 = h1 @ params["w2h"] + action @ params["w2a"] + params["b2"]
    h2 = jnp.maximum(z2, 0.0)
    return h2 @ params["w3"] + params["b3"]


def critic_reference_quant(state, action, params):
    """Reference with the same bf16 weight/activation quantization the kernel uses."""
    eps = 1e-5
    w1 = params["w1"].astype(jnp.bfloat16)
    w2h = params["w2h"].astype(jnp.bfloat16)
    w2a = params["w2a"].astype(jnp.bfloat16)
    z1 = jnp.dot(state.astype(jnp.bfloat16), w1, preferred_element_type=jnp.float32)
    mean = jnp.mean(z1, axis=0, keepdims=True)
    var = jnp.mean((z1 - mean) ** 2, axis=0, keepdims=True)
    scale = params["gamma"] * jax.lax.rsqrt(var + eps)
    shift = params["beta"] - mean * scale
    h1 = jnp.maximum(z1 * scale + shift, 0.0)
    z2 = (jnp.dot(h1.astype(jnp.bfloat16), w2h, preferred_element_type=jnp.float32)
          + jnp.dot(action.astype(jnp.bfloat16), w2a, preferred_element_type=jnp.float32)
          + params["b2"])
    h2 = jnp.maximum(z2, 0.0)
    return jnp.sum(h2 * params["w3"].T, axis=-1, keepdims=True) + params["b3"]


# ---------------------------------------------------------------------------
if __name__ == "__main__":
    B, STATE, ACTION = 8, 16, 4
    FIRST_FC, SECOND_FC = 400, 300

    key = jax.random.PRNGKey(0)
    k_state, k_action, k_params = jax.random.split(key, 3)

    state = jax.random.normal(k_state, (B, STATE), jnp.float32)
    action = jax.random.normal(k_action, (B, ACTION), jnp.float32)
    params = init_params(k_params, STATE, ACTION, FIRST_FC, SECOND_FC)

    w1, w2h, w2a, vec = prep_kernel_inputs(params, FIRST_FC, SECOND_FC)
    q = critic_forward(state, action, w1, w2h, w2a, vec)
    q = jax.block_until_ready(q)
    assert q.shape == (B, 1)

    # Exact check vs. a reference using the same bf16 quantization (padding + b1
    # removal are mathematically exact, so this should match very tightly).
    q_quant = critic_reference_quant(state, action, params)
    assert jnp.allclose(q, q_quant, atol=1e-4, rtol=1e-4), (q, q_quant)

    # Fidelity check vs. the module-faithful full-f32 forward (bf16 weight cast is
    # the only approximation).
    q_f32 = critic_reference_f32(state, action, params)
    assert jnp.allclose(q, q_f32, atol=5e-3, rtol=5e-2), (q, q_f32)

    print("KERNEL_OK")
</pallas_src>

<mosaic_0001>
module attributes {stable_mosaic.version = 11 : i64} {
  func.func @critic_kernel(%arg0: memref<8x16xf32, #tpu.memory_space<vmem>>, %arg1: memref<8x4xf32, #tpu.memory_space<vmem>>, %arg2: memref<16x512xbf16, #tpu.memory_space<vmem>>, %arg3: memref<512x384xbf16, #tpu.memory_space<vmem>>, %arg4: memref<4x384xbf16, #tpu.memory_space<vmem>>, %arg5: memref<8x512xf32, #tpu.memory_space<vmem>>, %arg6: memref<8x1xf32, #tpu.memory_space<vmem>>) attributes {dimension_semantics = [], scalar_prefetch = 0 : i64, scratch_operands = 0 : i64, tpu.core_type = #tpu.core_type<tc>} {
    %c0 = arith.constant 0 : index
    %c0_0 = arith.constant 0 : index
    %0 = vector.load %arg0[%c0, %c0_0] : memref<8x16xf32, #tpu.memory_space<vmem>>, vector<8x16xf32>
    %1 = arith.truncf %0 : vector<8x16xf32> to vector<8x16xbf16>
    %c0_1 = arith.constant 0 : index
    %c0_2 = arith.constant 0 : index
    %2 = vector.load %arg1[%c0_1, %c0_2] : memref<8x4xf32, #tpu.memory_space<vmem>>, vector<8x4xf32>
    %3 = arith.truncf %2 : vector<8x4xf32> to vector<8x4xbf16>
    %c0_3 = arith.constant 0 : index
    %c0_4 = arith.constant 0 : index
    %4 = vector.load %arg5[%c0_3, %c0_4] : memref<8x512xf32, #tpu.memory_space<vmem>>, vector<1x512xf32>
    %c1 = arith.constant 1 : index
    %c0_5 = arith.constant 0 : index
    %5 = vector.load %arg5[%c1, %c0_5] : memref<8x512xf32, #tpu.memory_space<vmem>>, vector<1x512xf32>
    %c2 = arith.constant 2 : index
    %c0_6 = arith.constant 0 : index
    %6 = vector.load %arg5[%c2, %c0_6] : memref<8x512xf32, #tpu.memory_space<vmem>>, vector<1x384xf32>
    %c3 = arith.constant 3 : index
    %c0_7 = arith.constant 0 : index
    %7 = vector.load %arg5[%c3, %c0_7] : memref<8x512xf32, #tpu.memory_space<vmem>>, vector<1x384xf32>
    %c4 = arith.constant 4 : index
    %c0_8 = arith.constant 0 : index
    %8 = vector.load %arg5[%c4, %c0_8] : memref<8x512xf32, #tpu.memory_space<vmem>>, vector<1x1xf32>
    %c0_9 = arith.constant 0 : index
    %c0_10 = arith.constant 0 : index
    %9 = vector.load %arg2[%c0_9, %c0_10] : memref<16x512xbf16, #tpu.memory_space<vmem>>, vector<16x512xbf16>
    %cst = arith.constant dense<0.000000e+00> : vector<8x512xf32>
    %10 = tpu.matmul %1, %9, %cst {dimension_numbers = #tpu.dot_dimension_numbers<[1], [0], [0], [1], [0, 0, 1, 1], [], []>} : vector<8x16xbf16>, vector<16x512xbf16>, vector<8x512xf32> -> vector<8x512xf32>
    %cst_11 = arith.constant dense<0.000000e+00> : vector<512xf32>
    %11 = vector.multi_reduction <add>, %10, %cst_11 [0] : vector<8x512xf32> to vector<512xf32>
    %12 = vector.shape_cast %11 : vector<512xf32> to vector<1x512xf32>
    %cst_12 = arith.constant 8.000000e+00 : f32
    %13 = vector.broadcast %cst_12 : f32 to vector<1x512xf32>
    %14 = arith.divf %12, %13 : vector<1x512xf32>
    %15 = vector.broadcast %14 : vector<1x512xf32> to vector<8x512xf32>
    %16 = arith.subf %10, %15 : vector<8x512xf32>
    %17 = arith.mulf %16, %16 : vector<8x512xf32>
    %cst_13 = arith.constant dense<0.000000e+00> : vector<512xf32>
    %18 = vector.multi_reduction <add>, %17, %cst_13 [0] : vector<8x512xf32> to vector<512xf32>
    %19 = vector.shape_cast %18 : vector<512xf32> to vector<1x512xf32>
    %cst_14 = arith.constant 8.000000e+00 : f32
    %20 = vector.broadcast %cst_14 : f32 to vector<1x512xf32>
    %21 = arith.divf %19, %20 : vector<1x512xf32>
    %cst_15 = arith.constant 9.99999974E-6 : f32
    %22 = vector.broadcast %cst_15 : f32 to vector<1x512xf32>
    %23 = arith.addf %21, %22 : vector<1x512xf32>
    %24 = math.rsqrt %23 : vector<1x512xf32>
    %25 = arith.mulf %4, %24 : vector<1x512xf32>
    %26 = arith.mulf %14, %25 : vector<1x512xf32>
    %27 = arith.subf %5, %26 : vector<1x512xf32>
    %28 = vector.broadcast %25 : vector<1x512xf32> to vector<8x512xf32>
    %29 = arith.mulf %10, %28 : vector<8x512xf32>
    %30 = vector.broadcast %27 : vector<1x512xf32> to vector<8x512xf32>
    %31 = arith.addf %29, %30 : vector<8x512xf32>
    %cst_16 = arith.constant 0.000000e+00 : f32
    %32 = vector.broadcast %cst_16 : f32 to vector<8x512xf32>
    %33 = arith.maximumf %31, %32 : vector<8x512xf32>
    %34 = arith.truncf %33 : vector<8x512xf32> to vector<8x512xbf16>
    %c0_17 = arith.constant 0 : index
    %c0_18 = arith.constant 0 : index
    %35 = vector.load %arg3[%c0_17, %c0_18] : memref<512x384xbf16, #tpu.memory_space<vmem>>, vector<512x384xbf16>
    %cst_19 = arith.constant dense<0.000000e+00> : vector<8x384xf32>
    %36 = tpu.matmul %34, %35, %cst_19 {dimension_numbers = #tpu.dot_dimension_numbers<[1], [0], [0], [1], [0, 0, 1, 1], [], []>} : vector<8x512xbf16>, vector<512x384xbf16>, vector<8x384xf32> -> vector<8x384xf32>
    %c0_20 = arith.constant 0 : index
    %c0_21 = arith.constant 0 : index
    %37 = vector.load %arg4[%c0_20, %c0_21] : memref<4x384xbf16, #tpu.memory_space<vmem>>, vector<4x384xbf16>
    %cst_22 = arith.constant dense<0.000000e+00> : vector<8x384xf32>
    %38 = tpu.matmul %3, %37, %cst_22 {dimension_numbers = #tpu.dot_dimension_numbers<[1], [0], [0], [1], [0, 0, 1, 1], [], []>} : vector<8x4xbf16>, vector<4x384xbf16>, vector<8x384xf32> -> vector<8x384xf32>
    %39 = arith.addf %36, %38 : vector<8x384xf32>
    %40 = vector.broadcast %6 : vector<1x384xf32> to vector<8x384xf32>
    %41 = arith.addf %39, %40 : vector<8x384xf32>
    %cst_23 = arith.constant 0.000000e+00 : f32
    %42 = vector.broadcast %cst_23 : f32 to vector<8x384xf32>
    %43 = arith.maximumf %41, %42 : vector<8x384xf32>
    %44 = vector.broadcast %7 : vector<1x384xf32> to vector<8x384xf32>
    %45 = arith.mulf %43, %44 : vector<8x384xf32>
    %cst_24 = arith.constant dense<0.000000e+00> : vector<8xf32>
    %46 = vector.multi_reduction <add>, %45, %cst_24 [1] : vector<8x384xf32> to vector<8xf32>
    %47 = vector.shape_cast %46 : vector<8xf32> to vector<8x1xf32>
    %48 = vector.broadcast %8 : vector<1x1xf32> to vector<8x1xf32>
    %49 = arith.addf %47, %48 : vector<8x1xf32>
    %c0_25 = arith.constant 0 : index
    %c0_26 = arith.constant 0 : index
    %50 = vector.load %arg6[%c0_25, %c0_26] : memref<8x1xf32, #tpu.memory_space<vmem>>, vector<8x1xf32>
    tpu.vector_store %arg6[%c0_25, %c0_26], %49 {strides = array<i32>} : memref<8x1xf32, #tpu.memory_space<vmem>>, vector<8x1xf32>,
    return
  }
}

</mosaic_0001>

<llo_original>
// kernel: tpu_custom_call.1
$region0: #{tpu_custom_call.1}
  #allocation0 [shape = 'u32[]', space=smem, size = 0x4, offset = 0x4, fixed_abs, tag = 'smem constant byte address 0x4 - core index']
  #allocation1 [shape = 'u32[144,128]{1,0:T(1,128)}', space=vmem, size = 0x12000, scoped, tag = 'internal scratch']
  %s0 = inlined_call_operand.vmem [shape: f32[8,16], index: 0, kind: input, shape index: {}]
  %s1 = inlined_call_operand.vmem [shape: f32[8,4], index: 1, kind: input, shape index: {}]
  %s2 = inlined_call_operand.hbm [shape: bf16[16,512], index: 2, kind: input, shape index: {}]
  %s3 = inlined_call_operand.hbm [shape: bf16[512,384], index: 3, kind: input, shape index: {}]
  %s4 = inlined_call_operand.vmem [shape: bf16[4,384], index: 4, kind: input, shape index: {}]
  %s5 = inlined_call_operand.hbm [shape: f32[8,512], index: 5, kind: input, shape index: {}]
  %s6 = inlined_call_operand.vmem [shape: f32[8,1], index: 6, kind: output, shape index: {}]
  %s7 = sld [smem:[#allocation0]]
  $region46: #{tpu_custom_call.1} parent=0
    _
  %s9 = ssub.s32 1, %s7
  %s10 = scalar_select 0, %s9, %s7
  $region1: #{tpu_custom_call.1} parent=0
    #allocation2 [shape = 'u8[16384]{0}', space=vmem, size = 0x4000, scoped, tag = 'input window, operand 2, single buffered']
    #allocation3 [shape = 's32[1]{0}', space=sflag, size = 0x4, scoped, tag = 'scoped memory for tpu_custom_call.1']
    #allocation4 [shape = 'u8[393216]{0}', space=vmem, size = 0x60000, scoped, tag = 'input window, operand 3, single buffered']
    #allocation5 [shape = 's32[1]{0}', space=sflag, size = 0x4, scoped, tag = 'scoped memory for tpu_custom_call.1']
    #allocation6 [shape = 'u8[16384]{0}', space=vmem, size = 0x4000, scoped, tag = 'input window, operand 5, single buffered']
    %11 = vsyncpa [#allocation3], 0
    %12 = vsyncpa [#allocation5], 0
    // Predicated region
    $region2: #{tpu_custom_call.1} parent=1 // pred_check
      _
    $region3: #{tpu_custom_call.1} parent=1 // pred_check_branch
      %14 = sbr.rel (0) target = $region5
    $region4: #{tpu_custom_call.1} parent=1 // pred_region
      _
    $region5: #{tpu_custom_call.1} parent=1 // pred_fallthru
      _
    // Predicated region
    $region6: #{tpu_custom_call.1} parent=1 // pred_check
      _
    $region7: #{tpu_custom_call.1} parent=1 // pred_check_branch
      %16 = sbr.rel (0) target = $region9
    $region8: #{tpu_custom_call.1} parent=1 // pred_region
      _
    $region9: #{tpu_custom_call.1} parent=1 // pred_fallthru
      _
    // Predicated region
    $region10: #{tpu_custom_call.1} parent=1 // pred_check
      _
    $region11: #{tpu_custom_call.1} parent=1 // pred_check_branch
      %18 = sbr.rel (0) target = $region13
    $region12: #{tpu_custom_call.1} parent=1 // pred_region
      %s20 = ssub.s32 512, 512
      %21 = vsyncadd [#allocation3], %s20
      %s22 = sshll.u32 [#allocation2], 4
      %s23 = int_to_ptr.vmem [resolvable:$true] %s22
      %28 = dma.hbm_to_vmem [thread:$0]  %s2, 512, %s23, [#allocation3], 256, 256, 16
    $region13: #{tpu_custom_call.1} parent=1 // pred_fallthru
      _
    // Predicated region
    $region14: #{tpu_custom_call.1} parent=1 // pred_check
      _
    $region15: #{tpu_custom_call.1} parent=1 // pred_check_branch
      %30 = sbr.rel (0) target = $region17
    $region16: #{tpu_custom_call.1} parent=1 // pred_region
      %s32 = ssub.s32 12288, 12288
      %33 = vsyncadd [#allocation5], %s32
      %s34 = sshll.u32 [#allocation4], 4
      %s35 = int_to_ptr.vmem [resolvable:$true] %s34
      %40 = dma.hbm_to_vmem [thread:$0]  %s3, 12288, %s35, [#allocation5], 192, 192, 12
    $region17: #{tpu_custom_call.1} parent=1 // pred_fallthru
      _
    // Predicated region
    $region18: #{tpu_custom_call.1} parent=1 // pred_check
      _
    $region19: #{tpu_custom_call.1} parent=1 // pred_check_branch
      %42 = sbr.rel (0) target = $region21
    $region20: #{tpu_custom_call.1} parent=1 // pred_region
      _
    $region21: #{tpu_custom_call.1} parent=1 // pred_fallthru
      _
    // Predicated region
    $region22: #{tpu_custom_call.1} parent=1 // pred_check
      _
    $region23: #{tpu_custom_call.1} parent=1 // pred_check_branch
      %44 = sbr.rel (0) target = $region25
    $region24: #{tpu_custom_call.1} parent=1 // pred_region
      %s46 = ssub.s32 512, 512
      %47 = vsyncadd [#allocation5], %s46
      %s49 = sshll.u32 [#allocation6], 4
      %s50 = int_to_ptr.vmem [resolvable:$true] %s49
      %52 = dma.hbm_to_vmem [thread:$0]  %s5, 512, %s50, [#allocation5]
    $region25: #{tpu_custom_call.1} parent=1 // pred_fallthru
      _
    // Predicated region
    $region26: #{tpu_custom_call.1} parent=1 // pred_check
      _
    $region27: #{tpu_custom_call.1} parent=1 // pred_check_branch
      %54 = sbr.rel (0) target = $region29
    $region28: #{tpu_custom_call.1} parent=1 // pred_region
      %55 = dma.done [#allocation3], 512
    $region29: #{tpu_custom_call.1} parent=1 // pred_fallthru
      _
    // Predicated region
    $region30: #{tpu_custom_call.1} parent=1 // pred_check
      _
    $region31: #{tpu_custom_call.1} parent=1 // pred_check_branch
      %57 = sbr.rel (0) target = $region33
    $region32: #{tpu_custom_call.1} parent=1 // pred_region
      %58 = dma.done [#allocation5], 12288
    $region33: #{tpu_custom_call.1} parent=1 // pred_fallthru
      _
    // Predicated region
    $region34: #{tpu_custom_call.1} parent=1 // pred_check
      _
    $region35: #{tpu_custom_call.1} parent=1 // pred_check_branch
      %60 = sbr.rel (0) target = $region37
    $region36: #{tpu_custom_call.1} parent=1 // pred_region
      %61 = dma.done [#allocation5], 512
    $region37: #{tpu_custom_call.1} parent=1 // pred_fallthru
      _
    %v63 = vld [vmem:[%s0] sm:$0xff]
    %v64 = vpack.c.bf16 %v63, %v63
    %v65 = vld [vmem:[%s1] sm:$0xff]
    %v66 = vpack.c.bf16 %v65, %v65
    %v67 = vld [vmem:[#allocation6] ss:$8 sm:$0xf]
    %s68 = scalar_lea.vmem [#allocation6], 1
    %v69 = vld [vmem:[%s68] ss:$8 sm:$0xf]
    %s70 = scalar_lea.vmem [#allocation6], 2
    %v71 = vld [vmem:[%s70] ss:$8 sm:$0x7]
    %s72 = scalar_lea.vmem [#allocation6], 3
    %v73 = vld [vmem:[%s72] ss:$8 sm:$0x7]
    %v74 = vld [vmem:[#allocation6 + $0x4] ss:$0 sm:$0xff]
    %v75 = vld [vmem:[#allocation2] sm:$0xff]
    %v76 = vld [vmem:[#allocation2 + $0x8] sm:$0xff]
    %v77 = vld [vmem:[#allocation2 + $0x10] sm:$0xff]
    %v78 = vld [vmem:[#allocation2 + $0x18] sm:$0xff]
    %v83 = vunpack.c.l.b16 %v75
    %v84 = vunpack.c.h.b16 %v75
    %v85 = vunpack.c.l.b16 %v76
    %v86 = vunpack.c.h.b16 %v76
    %v87 = vunpack.c.l.b16 %v77
    %v88 = vunpack.c.h.b16 %v77
    %v89 = vunpack.c.l.b16 %v78
    %v90 = vunpack.c.h.b16 %v78
    %v91 = vpack.c.b16 %v87, %v83
    %v92 = vpack.c.b16 %v88, %v84
    %v93 = vpack.c.b16 %v89, %v85
    %v94 = vpack.c.b16 %v90, %v86
    %vm99 = vcmask 130048
    %v101 = vsel %vm99, %v64, 0
    %103 = vmatprep.subr.bf16.mxu0 %v92
    %104 = vmatpush1.bf16.msra.mxu0 %v91
    %105 = vmatprep.subr.bf16.mxu0 0
    %106 = vmatpush1.bf16.msra.mxu0 0
    %107 = vmatprep.subr.bf16.mxu0 0
    %108 = vmatpush1.bf16.msra.mxu0 0
    %109 = vmatprep.subr.bf16.mxu0 0
    %110 = vmatpush1.bf16.msra.mxu0 0
    %111 = vmatprep.subr.bf16.mxu0 0
    %112 = vmatpush1.bf16.msra.mxu0 0
    %113 = vmatprep.subr.bf16.mxu0 0
    %114 = vmatpush1.bf16.msra.mxu0 0
    %115 = vmatprep.subr.bf16.mxu0 0
    %116 = vmatpush1.bf16.msra.mxu0 0
    %117 = vmatprep.subr.bf16.mxu0 0
    %118 = vmatpush1.bf16.msra.mxu0 0
    %119 = vmatprep.subr.bf16.mxu0 0
    %120 = vmatpush1.bf16.msra.mxu0 0
    %121 = vmatprep.subr.bf16.mxu0 0
    %122 = vmatpush1.bf16.msra.mxu0 0
    %123 = vmatprep.subr.bf16.mxu0 0
    %124 = vmatpush1.bf16.msra.mxu0 0
    %125 = vmatprep.subr.bf16.mxu0 0
    %126 = vmatpush1.bf16.msra.mxu0 0
    %127 = vmatprep.subr.bf16.mxu0 0
    %128 = vmatpush1.bf16.msra.mxu0 0
    %129 = vmatprep.subr.bf16.mxu0 0
    %130 = vmatpush1.bf16.msra.mxu0 0
    %131 = vmatprep.subr.bf16.mxu0 0
    %132 = vmatpush1.bf16.msra.mxu0 0
    %133 = vmatprep.subr.bf16.mxu0 0
    %134 = vmatpush1.bf16.msra.mxu0 0
    %135 = vmatprep.mubr.bf16.mxu0 0
    %136 = vmatmul.mubr.bf16.gmra.mrb[0].mxu0 %v101
    %v137 = vpop.f32.mrb[0].mxu0
    %v138 = vadd.f32 0.0, %v137
    %v139 = vpop.f32.mrb[0].mxu0
    %v140 = vadd.f32 0.0, %v139
    %v141 = vpop.f32.mrb[0].mxu0
    %v142 = vpop.f32.mrb[0].mxu0
    %143 = vdwg.mxu0
    %144 = vmatprep.subr.bf16.mxu0 %v94
    %145 = vmatpush1.bf16.msra.mxu0 %v93
    %146 = vmatprep.subr.bf16.mxu0 0
    %147 = vmatpush1.bf16.msra.mxu0 0
    %148 = vmatprep.subr.bf16.mxu0 0
    %149 = vmatpush1.bf16.msra.mxu0 0
    %150 = vmatprep.subr.bf16.mxu0 0
    %151 = vmatpush1.bf16.msra.mxu0 0
    %152 = vmatprep.subr.bf16.mxu0 0
    %153 = vmatpush1.bf16.msra.mxu0 0
    %154 = vmatprep.subr.bf16.mxu0 0
    %155 = vmatpush1.bf16.msra.mxu0 0
    %156 = vmatprep.subr.bf16.mxu0 0
    %157 = vmatpush1.bf16.msra.mxu0 0
    %158 = vmatprep.subr.bf16.mxu0 0
    %159 = vmatpush1.bf16.msra.mxu0 0
    %160 = vmatprep.subr.bf16.mxu0 0
    %161 = vmatpush1.bf16.msra.mxu0 0
    %162 = vmatprep.subr.bf16.mxu0 0
    %163 = vmatpush1.bf16.msra.mxu0 0
    %164 = vmatprep.subr.bf16.mxu0 0
    %165 = vmatpush1.bf16.msra.mxu0 0
    %166 = vmatprep.subr.bf16.mxu0 0
    %167 = vmatpush1.bf16.msra.mxu0 0
    %168 = vmatprep.subr.bf16.mxu0 0
    %169 = vmatpush1.bf16.msra.mxu0 0
    %170 = vmatprep.subr.bf16.mxu0 0
    %171 = vmatpush1.bf16.msra.mxu0 0
    %172 = vmatprep.subr.bf16.mxu0 0
    %173 = vmatpush1.bf16.msra.mxu0 0
    %174 = vmatprep.subr.bf16.mxu0 0
    %175 = vmatpush1.bf16.msra.mxu0 0
    %176 = vmatprep.mubr.bf16.mxu0 0
    %177 = vmatmul.mubr.bf16.gmra.mrb[0].mxu0 %v101
    %v178 = vpop.f32.mrb[0].mxu0
    %v179 = vadd.f32 0.0, %v178
    %v180 = vpop.f32.mrb[0].mxu0
    %v181 = vadd.f32 0.0, %v180
    %v182 = vpop.f32.mrb[0].mxu0
    %v183 = vpop.f32.mrb[0].mxu0
    %184 = vdwg.mxu0
    %v185 = vrot.slane %v138, 4
    %v186 = vadd.f32 %v138, %v185
    %v187 = vrot.slane %v186, 2
    %v188 = vadd.f32 %v186, %v187
    %v189 = vrot.slane %v188, 1
    %v190 = vadd.f32 %v188, %v189
    %v191 = vrot.slane %v140, 4
    %v192 = vadd.f32 %v140, %v191
    %v193 = vrot.slane %v192, 2
    %v194 = vadd.f32 %v192, %v193
    %v195 = vrot.slane %v194, 1
    %v196 = vadd.f32 %v194, %v195
    %v197 = vrot.slane %v179, 4
    %v198 = vadd.f32 %v179, %v197
    %v199 = vrot.slane %v198, 2
    %v200 = vadd.f32 %v198, %v199
    %v201 = vrot.slane %v200, 1
    %v202 = vadd.f32 %v200, %v201
    %v203 = vrot.slane %v181, 4
    %v204 = vadd.f32 %v181, %v203
    %v205 = vrot.slane %v204, 2
    %v206 = vadd.f32 %v204, %v205
    %v207 = vrot.slane %v206, 1
    %v208 = vadd.f32 %v206, %v207
    %v209 = vrcp.pop 8.0
    %v210 = vmul.f32 %v190, %v209
    %v211 = vmul.f32 %v196, %v209
    %v212 = vmul.f32 %v202, %v209
    %v213 = vmul.f32 %v208, %v209
    %v214 = vsub.f32 %v138, %v210
    %v215 = vsub.f32 %v140, %v211
    %v216 = vsub.f32 %v179, %v212
    %v217 = vsub.f32 %v181, %v213
    %v218 = vmul.f32 %v214, %v214
    %v219 = vmul.f32 %v215, %v215
    %v220 = vmul.f32 %v216, %v216
    %v221 = vmul.f32 %v217, %v217
    %v222 = vrot.slane %v218, 4
    %v223 = vadd.f32 %v218, %v222
    %v224 = vrot.slane %v223, 2
    %v225 = vadd.f32 %v223, %v224
    %v226 = vrot.slane %v225, 1
    %v227 = vadd.f32 %v225, %v226
    %v228 = vrot.slane %v219, 4
    %v229 = vadd.f32 %v219, %v228
    %v230 = vrot.slane %v229, 2
    %v231 = vadd.f32 %v229, %v230
    %v232 = vrot.slane %v231, 1
    %v233 = vadd.f32 %v231, %v232
    %v234 = vrot.slane %v220, 4
    %v235 = vadd.f32 %v220, %v234
    %v236 = vrot.slane %v235, 2
    %v237 = vadd.f32 %v235, %v236
    %v238 = vrot.slane %v237, 1
    %v239 = vadd.f32 %v237, %v238
    %v240 = vrot.slane %v221, 4
    %v241 = vadd.f32 %v221, %v240
    %v242 = vrot.slane %v241, 2
    %v243 = vadd.f32 %v241, %v242
    %v244 = vrot.slane %v243, 1
    %v245 = vadd.f32 %v243, %v244
    %v246 = vmul.f32 %v227, %v209
    %v247 = vmul.f32 %v233, %v209
    %v248 = vmul.f32 %v239, %v209
    %v249 = vmul.f32 %v245, %v209
    %v250 = vadd.f32 %v246, 1e-05
    %v251 = vadd.f32 %v247, 1e-05
    %v252 = vadd.f32 %v248, 1e-05
    %v253 = vadd.f32 %v249, 1e-05
    %v254 = vrsqrt.pop %v250
    %v255 = vrsqrt.pop %v251
    %v256 = vrsqrt.pop %v252
    %v257 = vrsqrt.pop %v253
    %v262 = vcombine.low %v254, %v255
    %v263 = vcombine.low %v256, %v257
    %v265 = vunpack.c.l.s4 1966171168
    %v266 = vunpack.c.0.s8 %v265
    %v267 = vlaneseq
    %v268 = vshrl.u32 %v267, 7
    %v269 = vsub.s32 %v266, %v268
    %v270 = vrot.slane %v262, %v269
    %v272 = vunpack.c.l.s4 1966171168
    %v273 = vunpack.c.0.s8 %v272
    %v274 = vlaneseq
    %v275 = vshrl.u32 %v274, 7
    %v276 = vsub.s32 %v273, %v275
    %v277 = vrot.slane %v263, %v276
    %v278 = vcombine.low %v270, %v277
    %v280 = vunpack.c.l.s4 1966171168
    %v281 = vunpack.c.0.s8 %v280
    %v282 = vlaneseq
    %v283 = vshrl.u32 %v282, 7
    %v284 = vsub.s32 %v281, %v283
    %v285 = vrot.slane %v278, %v284
    %v287 = vmul.f32 %v67, %v285
    %v289 = vlaneseq
    %v290 = vshrl.u32 %v289, 7
    %v291 = vsub.s32 0, %v290
    %v292 = vrot.slane %v287, %v291
    %v293 = vlaneseq
    %v294 = vshrl.u32 %v293, 7
    %v295 = vsub.s32 1, %v294
    %v296 = vrot.slane %v287, %v295
    %v297 = vlaneseq
    %v298 = vshrl.u32 %v297, 7
    %v299 = vsub.s32 2, %v298
    %v300 = vrot.slane %v287, %v299
    %v301 = vlaneseq
    %v302 = vshrl.u32 %v301, 7
    %v303 = vsub.s32 3, %v302
    %v304 = vrot.slane %v287, %v303
    %v309 = vmul.f32 %v210, %v292
    %v310 = vmul.f32 %v211, %v296
    %v311 = vmul.f32 %v212, %v300
    %v312 = vmul.f32 %v213, %v304
    %v317 = vcombine.low %v309, %v310
    %v318 = vcombine.low %v311, %v312
    %v320 = vunpack.c.l.s4 1966171168
    %v321 = vunpack.c.0.s8 %v320
    %v322 = vlaneseq
    %v323 = vshrl.u32 %v322, 7
    %v324 = vsub.s32 %v321, %v323
    %v325 = vrot.slane %v317, %v324
    %v327 = vunpack.c.l.s4 1966171168
    %v328 = vunpack.c.0.s8 %v327
    %v329 = vlaneseq
    %v330 = vshrl.u32 %v329, 7
    %v331 = vsub.s32 %v328, %v330
    %v332 = vrot.slane %v318, %v331
    %v333 = vcombine.low %v325, %v332
    %v335 = vunpack.c.l.s4 1966171168
    %v336 = vunpack.c.0.s8 %v335
    %v337 = vlaneseq
    %v338 = vshrl.u32 %v337, 7
    %v339 = vsub.s32 %v336, %v338
    %v340 = vrot.slane %v333, %v339
    %v342 = vsub.f32 %v69, %v340
    %v343 = vmul.f32 %v138, %v292
    %v344 = vmul.f32 %v140, %v296
    %v345 = vmul.f32 %v179, %v300
    %v346 = vmul.f32 %v181, %v304
    %v348 = vlaneseq
    %v349 = vshrl.u32 %v348, 7
    %v350 = vsub.s32 0, %v349
    %v351 = vrot.slane %v342, %v350
    %v352 = vlaneseq
    %v353 = vshrl.u32 %v352, 7
    %v354 = vsub.s32 1, %v353
    %v355 = vrot.slane %v342, %v354
    %v356 = vlaneseq
    %v357 = vshrl.u32 %v356, 7
    %v358 = vsub.s32 2, %v357
    %v359 = vrot.slane %v342, %v358
    %v360 = vlaneseq
    %v361 = vshrl.u32 %v360, 7
    %v362 = vsub.s32 3, %v361
    %v363 = vrot.slane %v342, %v362
    %v368 = vadd.f32 %v343, %v351
    %v369 = vadd.f32 %v344, %v355
    %v370 = vadd.f32 %v345, %v359
    %v371 = vadd.f32 %v346, %v363
    %v372 = vmax.f32 %v368, 0.0
    %v373 = vmax.f32 %v369, 0.0
    %v374 = vmax.f32 %v370, 0.0
    %v375 = vmax.f32 %v371, 0.0
    %v376 = vpack.c.bf16 %v372, %v372
    %v377 = vpack.c.bf16 %v373, %v373
    %v378 = vpack.c.bf16 %v374, %v374
    %v379 = vpack.c.bf16 %v375, %v375
    %v380 = vld [vmem:[#allocation4] sm:$0xff]
    %v381 = vld [vmem:[#allocation4 + $0x8] sm:$0xf]
    %v382 = vld [vmem:[#allocation4 + $0xc] sm:$0xff]
    %v383 = vld [vmem:[#allocation4 + $0x14] sm:$0xf]
    %v384 = vld [vmem:[#allocation4 + $0x18] sm:$0xff]
    %v385 = vld [vmem:[#allocation4 + $0x20] sm:$0xf]
    %v386 = vld [vmem:[#allocation4 + $0x24] sm:$0xff]
    %v387 = vld [vmem:[#allocation4 + $0x2c] sm:$0xf]
    %v388 = vld [vmem:[#allocation4 + $0x30] sm:$0xff]
    %v389 = vld [vmem:[#allocation4 + $0x38] sm:$0xf]
    %v390 = vld [vmem:[#allocation4 + $0x3c] sm:$0xff]
    %v391 = vld [vmem:[#allocation4 + $0x44] sm:$0xf]
    %v392 = vld [vmem:[#allocation4 + $0x48] sm:$0xff]
    %v393 = vld [vmem:[#allocation4 + $0x50] sm:$0xf]
    %v394 = vld [vmem:[#allocation4 + $0x54] sm:$0xff]
    %v395 = vld [vmem:[#allocation4 + $0x5c] sm:$0xf]
    %v396 = vld [vmem:[#allocation4 + $0x60] sm:$0xff]
    %v397 = vld [vmem:[#allocation4 + $0x68] sm:$0xf]
    %v398 = vld [vmem:[#allocation4 + $0x6c] sm:$0xff]
    %v399 = vld [vmem:[#allocation4 + $0x74] sm:$0xf]
    %v400 = vld [vmem:[#allocation4 + $0x78] sm:$0xff]
    %v401 = vld [vmem:[#allocation4 + $0x80] sm:$0xf]
    %v402 = vld [vmem:[#allocation4 + $0x84] sm:$0xff]
    %v403 = vld [vmem:[#allocation4 + $0x8c] sm:$0xf]
    %v404 = vld [vmem:[#allocation4 + $0x90] sm:$0xff]
    %v405 = vld [vmem:[#allocation4 + $0x98] sm:$0xf]
    %v406 = vld [vmem:[#allocation4 + $0x9c] sm:$0xff]
    %v407 = vld [vmem:[#allocation4 + $0xa4] sm:$0xf]
    %v408 = vld [vmem:[#allocation4 + $0xa8] sm:$0xff]
    %v409 = vld [vmem:[#allocation4 + $0xb0] sm:$0xf]
    %v410 = vld [vmem:[#allocation4 + $0xb4] sm:$0xff]
    %v411 = vld [vmem:[#allocation4 + $0xbc] sm:$0xf]
    %v412 = vld [vmem:[#allocation4 + $0xc0] sm:$0xff]
    %v413 = vld [vmem:[#allocation4 + $0xc8] sm:$0xf]
    %v414 = vld [vmem:[#allocation4 + $0xcc] sm:$0xff]
    %v415 = vld [vmem:[#allocation4 + $0xd4] sm:$0xf]
    %v416 = vld [vmem:[#allocation4 + $0xd8] sm:$0xff]
    %v417 = vld [vmem:[#allocation4 + $0xe0] sm:$0xf]
    %v418 = vld [vmem:[#allocation4 + $0xe4] sm:$0xff]
    %v419 = vld [vmem:[#allocation4 + $0xec] sm:$0xf]
    %v420 = vld [vmem:[#allocation4 + $0xf0] sm:$0xff]
    %v421 = vld [vmem:[#allocation4 + $0xf8] sm:$0xf]
    %v422 = vld [vmem:[#allocation4 + $0xfc] sm:$0xff]
    %v423 = vld [vmem:[#allocation4 + $0x104] sm:$0xf]
    %v424 = vld [vmem:[#allocation4 + $0x108] sm:$0xff]
    %v425 = vld [vmem:[#allocation4 + $0x110] sm:$0xf]
    %v426 = vld [vmem:[#allocation4 + $0x114] sm:$0xff]
    %v427 = vld [vmem:[#allocation4 + $0x11c] sm:$0xf]
    %v428 = vld [vmem:[#allocation4 + $0x120] sm:$0xff]
    %v429 = vld [vmem:[#allocation4 + $0x128] sm:$0xf]
    %v430 = vld [vmem:[#allocation4 + $0x12c] sm:$0xff]
    %v431 = vld [vmem:[#allocation4 + $0x134] sm:$0xf]
    %v432 = vld [vmem:[#allocation4 + $0x138] sm:$0xff]
    %v433 = vld [vmem:[#allocation4 + $0x140] sm:$0xf]
    %v434 = vld [vmem:[#allocation4 + $0x144] sm:$0xff]
    %v435 = vld [vmem:[#allocation4 + $0x14c] sm:$0xf]
    %v436 = vld [vmem:[#allocation4 + $0x150] sm:$0xff]
    %v437 = vld [vmem:[#allocation4 + $0x158] sm:$0xf]
    %v438 = vld [vmem:[#allocation4 + $0x15c] sm:$0xff]
    %v439 = vld [vmem:[#allocation4 + $0x164] sm:$0xf]
    %v440 = vld [vmem:[#allocation4 + $0x168] sm:$0xff]
    %v441 = vld [vmem:[#allocation4 + $0x170] sm:$0xf]
    %v442 = vld [vmem:[#allocation4 + $0x174] sm:$0xff]
    %v443 = vld [vmem:[#allocation4 + $0x17c] sm:$0xf]
    %v444 = vld [vmem:[#allocation4 + $0x180] sm:$0xff]
    %v445 = vld [vmem:[#allocation4 + $0x188] sm:$0xf]
    %v446 = vld [vmem:[#allocation4 + $0x18c] sm:$0xff]
    %v447 = vld [vmem:[#allocation4 + $0x194] sm:$0xf]
    %v448 = vld [vmem:[#allocation4 + $0x198] sm:$0xff]
    %v449 = vld [vmem:[#allocation4 + $0x1a0] sm:$0xf]
    %v450 = vld [vmem:[#allocation4 + $0x1a4] sm:$0xff]
    %v451 = vld [vmem:[#allocation4 + $0x1ac] sm:$0xf]
    %v452 = vld [vmem:[#allocation4 + $0x1b0] sm:$0xff]
    %v453 = vld [vmem:[#allocation4 + $0x1b8] sm:$0xf]
    %v454 = vld [vmem:[#allocation4 + $0x1bc] sm:$0xff]
    %v455 = vld [vmem:[#allocation4 + $0x1c4] sm:$0xf]
    %v456 = vld [vmem:[#allocation4 + $0x1c8] sm:$0xff]
    %v457 = vld [vmem:[#allocation4 + $0x1d0] sm:$0xf]
    %v458 = vld [vmem:[#allocation4 + $0x1d4] sm:$0xff]
    %v459 = vld [vmem:[#allocation4 + $0x1dc] sm:$0xf]
    %v460 = vld [vmem:[#allocation4 + $0x1e0] sm:$0xff]
    %v461 = vld [vmem:[#allocation4 + $0x1e8] sm:$0xf]
    %v462 = vld [vmem:[#allocation4 + $0x1ec] sm:$0xff]
    %v463 = vld [vmem:[#allocation4 + $0x1f4] sm:$0xf]
    %v464 = vld [vmem:[#allocation4 + $0x1f8] sm:$0xff]
    %v465 = vld [vmem:[#allocation4 + $0x200] sm:$0xf]
    %v466 = vld [vmem:[#allocation4 + $0x204] sm:$0xff]
    %v467 = vld [vmem:[#allocation4 + $0x20c] sm:$0xf]
    %v468 = vld [vmem:[#allocation4 + $0x210] sm:$0xff]
    %v469 = vld [vmem:[#allocation4 + $0x218] sm:$0xf]
    %v470 = vld [vmem:[#allocation4 + $0x21c] sm:$0xff]
    %v471 = vld [vmem:[#allocation4 + $0x224] sm:$0xf]
    %v472 = vld [vmem:[#allocation4 + $0x228] sm:$0xff]
    %v473 = vld [vmem:[#allocation4 + $0x230] sm:$0xf]
    %v474 = vld [vmem:[#allocation4 + $0x234] sm:$0xff]
    %v475 = vld [vmem:[#allocation4 + $0x23c] sm:$0xf]
    %v476 = vld [vmem:[#allocation4 + $0x240] sm:$0xff]
    %v477 = vld [vmem:[#allocation4 + $0x248] sm:$0xf]
    %v478 = vld [vmem:[#allocation4 + $0x24c] sm:$0xff]
    %v479 = vld [vmem:[#allocation4 + $0x254] sm:$0xf]
    %v480 = vld [vmem:[#allocation4 + $0x258] sm:$0xff]
    %v481 = vld [vmem:[#allocation4 + $0x260] sm:$0xf]
    %v482 = vld [vmem:[#allocation4 + $0x264] sm:$0xff]
    %v483 = vld [vmem:[#allocation4 + $0x26c] sm:$0xf]
    %v484 = vld [vmem:[#allocation4 + $0x270] sm:$0xff]
    %v485 = vld [vmem:[#allocation4 + $0x278] sm:$0xf]
    %v486 = vld [vmem:[#allocation4 + $0x27c] sm:$0xff]
    %v487 = vld [vmem:[#allocation4 + $0x284] sm:$0xf]
    %v488 = vld [vmem:[#allocation4 + $0x288] sm:$0xff]
    %v489 = vld [vmem:[#allocation4 + $0x290] sm:$0xf]
    %v490 = vld [vmem:[#allocation4 + $0x294] sm:$0xff]
    %v491 = vld [vmem:[#allocation4 + $0x29c] sm:$0xf]
    %v492 = vld [vmem:[#allocation4 + $0x2a0] sm:$0xff]
    %v493 = vld [vmem:[#allocation4 + $0x2a8] sm:$0xf]
    %v494 = vld [vmem:[#allocation4 + $0x2ac] sm:$0xff]
    %v495 = vld [vmem:[#allocation4 + $0x2b4] sm:$0xf]
    %v496 = vld [vmem:[#allocation4 + $0x2b8] sm:$0xff]
    %v497 = vld [vmem:[#allocation4 + $0x2c0] sm:$0xf]
    %v498 = vld [vmem:[#allocation4 + $0x2c4] sm:$0xff]
    %v499 = vld [vmem:[#allocation4 + $0x2cc] sm:$0xf]
    %v500 = vld [vmem:[#allocation4 + $0x2d0] sm:$0xff]
    %v501 = vld [vmem:[#allocation4 + $0x2d8] sm:$0xf]
    %v502 = vld [vmem:[#allocation4 + $0x2dc] sm:$0xff]
    %v503 = vld [vmem:[#allocation4 + $0x2e4] sm:$0xf]
    %v504 = vld [vmem:[#allocation4 + $0x2e8] sm:$0xff]
    %v505 = vld [vmem:[#allocation4 + $0x2f0] sm:$0xf]
    %v506 = vld [vmem:[#allocation4 + $0x2f4] sm:$0xff]
    %v507 = vld [vmem:[#allocation4 + $0x2fc] sm:$0xf]
    %v508 = vld [vmem:[%s4] sm:$0x3f]
    %v510 = vcombine.high %v508, %v508
    %v512 = vunpack.c.l.s4 1983009808
    %v513 = vunpack.c.0.s8 %v512
    %v514 = vlaneseq
    %v515 = vshrl.u32 %v514, 7
    %v516 = vsub.s32 %v513, %v515
    %v517 = vrot.slane %v508, %v516
    %v519 = vunpack.c.l.s4 1983009808
    %v520 = vunpack.c.0.s8 %v519
    %v521 = vlaneseq
    %v522 = vshrl.u32 %v521, 7
    %v523 = vsub.s32 %v520, %v522
    %v524 = vrot.slane %v510, %v523
    %v525 = vcombine.high %v517, %v517
    %vm526 = vcmask 31744
    %v528 = vsel %vm526, %v66, 0
    %vm530 = vcmask 1041408
    %v532 = vsel %vm530, %v517, 0
    %v535 = vsel %vm530, %v525, 0
    %v538 = vsel %vm530, %v524, 0
    %540 = vmatprep.subr.bf16.mxu0 %v535
    %541 = vmatpush1.bf16.msra.mxu0 %v532
    %542 = vmatprep.subr.bf16.mxu0 0
    %543 = vmatpush1.bf16.msra.mxu0 0
    %544 = vmatprep.subr.bf16.mxu0 0
    %545 = vmatpush1.bf16.msra.mxu0 0
    %546 = vmatprep.subr.bf16.mxu0 0
    %547 = vmatpush1.bf16.msra.mxu0 0
    %548 = vmatprep.subr.bf16.mxu0 0
    %549 = vmatpush1.bf16.msra.mxu0 0
    %550 = vmatprep.subr.bf16.mxu0 0
    %551 = vmatpush1.bf16.msra.mxu0 0
    %552 = vmatprep.subr.bf16.mxu0 0
    %553 = vmatpush1.bf16.msra.mxu0 0
    %554 = vmatprep.subr.bf16.mxu0 0
    %555 = vmatpush1.bf16.msra.mxu0 0
    %556 = vmatprep.subr.bf16.mxu0 0
    %557 = vmatpush1.bf16.msra.mxu0 0
    %558 = vmatprep.subr.bf16.mxu0 0
    %559 = vmatpush1.bf16.msra.mxu0 0
    %560 = vmatprep.subr.bf16.mxu0 0
    %561 = vmatpush1.bf16.msra.mxu0 0
    %562 = vmatprep.subr.bf16.mxu0 0
    %563 = vmatpush1.bf16.msra.mxu0 0
    %564 = vmatprep.subr.bf16.mxu0 0
    %565 = vmatpush1.bf16.msra.mxu0 0
    %566 = vmatprep.subr.bf16.mxu0 0
    %567 = vmatpush1.bf16.msra.mxu0 0
    %568 = vmatprep.subr.bf16.mxu0 0
    %569 = vmatpush1.bf16.msra.mxu0 0
    %570 = vmatprep.subr.bf16.mxu0 0
    %571 = vmatpush1.bf16.msra.mxu0 0
    %572 = vmatprep.mubr.bf16.mxu0 0
    %573 = vmatmul.mubr.bf16.gmra.mrb[0].mxu0 %v528
    %v574 = vpop.f32.mrb[0].mxu0
    %v575 = vadd.f32 0.0, %v574
    %v576 = vpop.f32.mrb[0].mxu0
    %v577 = vadd.f32 0.0, %v576
    %v578 = vpop.f32.mrb[0].mxu0
    %v579 = vpop.f32.mrb[0].mxu0
    %580 = vdwg.mxu0
    %581 = vmatprep.subr.bf16.mxu0 0
    %582 = vmatpush1.bf16.msra.mxu0 %v538
    %583 = vmatprep.subr.bf16.mxu0 0
    %584 = vmatpush1.bf16.msra.mxu0 0
    %585 = vmatprep.subr.bf16.mxu0 0
    %586 = vmatpush1.bf16.msra.mxu0 0
    %587 = vmatprep.subr.bf16.mxu0 0
    %588 = vmatpush1.bf16.msra.mxu0 0
    %589 = vmatprep.subr.bf16.mxu0 0
    %590 = vmatpush1.bf16.msra.mxu0 0
    %591 = vmatprep.subr.bf16.mxu0 0
    %592 = vmatpush1.bf16.msra.mxu0 0
    %593 = vmatprep.subr.bf16.mxu0 0
    %594 = vmatpush1.bf16.msra.mxu0 0
    %595 = vmatprep.subr.bf16.mxu0 0
    %596 = vmatpush1.bf16.msra.mxu0 0
    %597 = vmatprep.subr.bf16.mxu0 0
    %598 = vmatpush1.bf16.msra.mxu0 0
    %599 = vmatprep.subr.bf16.mxu0 0
    %600 = vmatpush1.bf16.msra.mxu0 0
    %601 = vmatprep.subr.bf16.mxu0 0
    %602 = vmatpush1.bf16.msra.mxu0 0
    %603 = vmatprep.subr.bf16.mxu0 0
    %604 = vmatpush1.bf16.msra.mxu0 0
    %605 = vmatprep.subr.bf16.mxu0 0
    %606 = vmatpush1.bf16.msra.mxu0 0
    %607 = vmatprep.subr.bf16.mxu0 0
    %608 = vmatpush1.bf16.msra.mxu0 0
    %609 = vmatprep.subr.bf16.mxu0 0
    %610 = vmatpush1.bf16.msra.mxu0 0
    %611 = vmatprep.subr.bf16.mxu0 0
    %612 = vmatpush1.bf16.msra.mxu0 0
    %613 = vmatprep.mubr.bf16.mxu0 0
    %614 = vmatmul.mubr.bf16.gmra.mrb[0].mxu0 %v528
    %v615 = vpop.f32.mrb[0].mxu0
    %v616 = vadd.f32 0.0, %v615
    %v617 = vpop.f32.mrb[0].mxu0
    %v618 = vpop.f32.mrb[0].mxu0
    %v619 = vpop.f32.mrb[0].mxu0
    %620 = vdwg.mxu0
    %v749 = vunpack.c.l.b16 %v380
    %v750 = vunpack.c.h.b16 %v380
    %v751 = vunpack.c.l.b16 %v381
    %v752 = vunpack.c.l.b16 %v382
    %v753 = vunpack.c.h.b16 %v382
    %v754 = vunpack.c.l.b16 %v383
    %v755 = vunpack.c.l.b16 %v384
    %v756 = vunpack.c.h.b16 %v384
    %v757 = vunpack.c.l.b16 %v385
    %v758 = vunpack.c.l.b16 %v386
    %v759 = vunpack.c.h.b16 %v386
    %v760 = vunpack.c.l.b16 %v387
    %v761 = vunpack.c.l.b16 %v388
    %v762 = vunpack.c.h.b16 %v388
    %v763 = vunpack.c.l.b16 %v389
    %v764 = vunpack.c.l.b16 %v390
    %v765 = vunpack.c.h.b16 %v390
    %v766 = vunpack.c.l.b16 %v391
    %v767 = vunpack.c.l.b16 %v392
    %v768 = vunpack.c.h.b16 %v392
    %v769 = vunpack.c.l.b16 %v393
    %v770 = vunpack.c.l.b16 %v394
    %v771 = vunpack.c.h.b16 %v394
    %v772 = vunpack.c.l.b16 %v395
    %v773 = vunpack.c.l.b16 %v396
    %v774 = vunpack.c.h.b16 %v396
    %v775 = vunpack.c.l.b16 %v397
    %v776 = vunpack.c.l.b16 %v398
    %v777 = vunpack.c.h.b16 %v398
    %v778 = vunpack.c.l.b16 %v399
    %v779 = vunpack.c.l.b16 %v400
    %v780 = vunpack.c.h.b16 %v400
    %v781 = vunpack.c.l.b16 %v401
    %v782 = vunpack.c.l.b16 %v402
    %v783 = vunpack.c.h.b16 %v402
    %v784 = vunpack.c.l.b16 %v403
    %v785 = vunpack.c.l.b16 %v404
    %v786 = vunpack.c.h.b16 %v404
    %v787 = vunpack.c.l.b16 %v405
    %v788 = vunpack.c.l.b16 %v406
    %v789 = vunpack.c.h.b16 %v406
    %v790 = vunpack.c.l.b16 %v407
    %v791 = vunpack.c.l.b16 %v408
    %v792 = vunpack.c.h.b16 %v408
    %v793 = vunpack.c.l.b16 %v409
    %v794 = vunpack.c.l.b16 %v410
    %v795 = vunpack.c.h.b16 %v410
    %v796 = vunpack.c.l.b16 %v411
    %v797 = vunpack.c.l.b16 %v412
    %v798 = vunpack.c.h.b16 %v412
    %v799 = vunpack.c.l.b16 %v413
    %v800 = vunpack.c.l.b16 %v414
    %v801 = vunpack.c.h.b16 %v414
    %v802 = vunpack.c.l.b16 %v415
    %v803 = vunpack.c.l.b16 %v416
    %v804 = vunpack.c.h.b16 %v416
    %v805 = vunpack.c.l.b16 %v417
    %v806 = vunpack.c.l.b16 %v418
    %v807 = vunpack.c.h.b16 %v418
    %v808 = vunpack.c.l.b16 %v419
    %v809 = vunpack.c.l.b16 %v420
    %v810 = vunpack.c.h.b16 %v420
    %v811 = vunpack.c.l.b16 %v421
    %v812 = vunpack.c.l.b16 %v422
    %v813 = vunpack.c.h.b16 %v422
    %v814 = vunpack.c.l.b16 %v423
    %v815 = vunpack.c.l.b16 %v424
    %v816 = vunpack.c.h.b16 %v424
    %v817 = vunpack.c.l.b16 %v425
    %v818 = vunpack.c.l.b16 %v426
    %v819 = vunpack.c.h.b16 %v426
    %v820 = vunpack.c.l.b16 %v427
    %v821 = vunpack.c.l.b16 %v428
    %v822 = vunpack.c.h.b16 %v428
    %v823 = vunpack.c.l.b16 %v429
    %v824 = vunpack.c.l.b16 %v430
    %v825 = vunpack.c.h.b16 %v430
    %v826 = vunpack.c.l.b16 %v431
    %v827 = vunpack.c.l.b16 %v432
    %v828 = vunpack.c.h.b16 %v432
    %v829 = vunpack.c.l.b16 %v433
    %v830 = vunpack.c.l.b16 %v434
    %v831 = vunpack.c.h.b16 %v434
    %v832 = vunpack.c.l.b16 %v435
    %v833 = vunpack.c.l.b16 %v436
    %v834 = vunpack.c.h.b16 %v436
    %v835 = vunpack.c.l.b16 %v437
    %v836 = vunpack.c.l.b16 %v438
    %v837 = vunpack.c.h.b16 %v438
    %v838 = vunpack.c.l.b16 %v439
    %v839 = vunpack.c.l.b16 %v440
    %v840 = vunpack.c.h.b16 %v440
    %v841 = vunpack.c.l.b16 %v441
    %v842 = vunpack.c.l.b16 %v442
    %v843 = vunpack.c.h.b16 %v442
    %v844 = vunpack.c.l.b16 %v443
    %v845 = vunpack.c.l.b16 %v444
    %v846 = vunpack.c.h.b16 %v444
    %v847 = vunpack.c.l.b16 %v445
    %v848 = vunpack.c.l.b16 %v446
    %v849 = vunpack.c.h.b16 %v446
    %v850 = vunpack.c.l.b16 %v447
    %v851 = vunpack.c.l.b16 %v448
    %v852 = vunpack.c.h.b16 %v448
    %v853 = vunpack.c.l.b16 %v449
    %v854 = vunpack.c.l.b16 %v450
    %v855 = vunpack.c.h.b16 %v450
    %v856 = vunpack.c.l.b16 %v451
    %v857 = vunpack.c.l.b16 %v452
    %v858 = vunpack.c.h.b16 %v452
    %v859 = vunpack.c.l.b16 %v453
    %v860 = vunpack.c.l.b16 %v454
    %v861 = vunpack.c.h.b16 %v454
    %v862 = vunpack.c.l.b16 %v455
    %v863 = vunpack.c.l.b16 %v456
    %v864 = vunpack.c.h.b16 %v456
    %v865 = vunpack.c.l.b16 %v457
    %v866 = vunpack.c.l.b16 %v458
    %v867 = vunpack.c.h.b16 %v458
    %v868 = vunpack.c.l.b16 %v459
    %v869 = vunpack.c.l.b16 %v460
    %v870 = vunpack.c.h.b16 %v460
    %v871 = vunpack.c.l.b16 %v461
    %v872 = vunpack.c.l.b16 %v462
    %v873 = vunpack.c.h.b16 %v462
    %v874 = vunpack.c.l.b16 %v463
    %v875 = vunpack.c.l.b16 %v464
    %v876 = vunpack.c.h.b16 %v464
    %v877 = vunpack.c.l.b16 %v465
    %v878 = vunpack.c.l.b16 %v466
    %v879 = vunpack.c.h.b16 %v466
    %v880 = vunpack.c.l.b16 %v467
    %v881 = vunpack.c.l.b16 %v468
    %v882 = vunpack.c.h.b16 %v468
    %v883 = vunpack.c.l.b16 %v469
    %v884 = vunpack.c.l.b16 %v470
    %v885 = vunpack.c.h.b16 %v470
    %v886 = vunpack.c.l.b16 %v471
    %v887 = vunpack.c.l.b16 %v472
    %v888 = vunpack.c.h.b16 %v472
    %v889 = vunpack.c.l.b16 %v473
    %v890 = vunpack.c.l.b16 %v474
    %v891 = vunpack.c.h.b16 %v474
    %v892 = vunpack.c.l.b16 %v475
    %v893 = vunpack.c.l.b16 %v476
    %v894 = vunpack.c.h.b16 %v476
    %v895 = vunpack.c.l.b16 %v477
    %v896 = vunpack.c.l.b16 %v478
    %v897 = vunpack.c.h.b16 %v478
    %v898 = vunpack.c.l.b16 %v479
    %v899 = vunpack.c.l.b16 %v480
    %v900 = vunpack.c.h.b16 %v480
    %v901 = vunpack.c.l.b16 %v481
    %v902 = vunpack.c.l.b16 %v482
    %v903 = vunpack.c.h.b16 %v482
    %v904 = vunpack.c.l.b16 %v483
    %v905 = vunpack.c.l.b16 %v484
    %v906 = vunpack.c.h.b16 %v484
    %v907 = vunpack.c.l.b16 %v485
    %v908 = vunpack.c.l.b16 %v486
    %v909 = vunpack.c.h.b16 %v486
    %v910 = vunpack.c.l.b16 %v487
    %v911 = vunpack.c.l.b16 %v488
    %v912 = vunpack.c.h.b16 %v488
    %v913 = vunpack.c.l.b16 %v489
    %v914 = vunpack.c.l.b16 %v490
    %v915 = vunpack.c.h.b16 %v490
    %v916 = vunpack.c.l.b16 %v491
    %v917 = vunpack.c.l.b16 %v492
    %v918 = vunpack.c.h.b16 %v492
    %v919 = vunpack.c.l.b16 %v493
    %v920 = vunpack.c.l.b16 %v494
    %v921 = vunpack.c.h.b16 %v494
    %v922 = vunpack.c.l.b16 %v495
    %v923 = vunpack.c.l.b16 %v496
    %v924 = vunpack.c.h.b16 %v496
    %v925 = vunpack.c.l.b16 %v497
    %v926 = vunpack.c.l.b16 %v498
    %v927 = vunpack.c.h.b16 %v498
    %v928 = vunpack.c.l.b16 %v499
    %v929 = vunpack.c.l.b16 %v500
    %v930 = vunpack.c.h.b16 %v500
    %v931 = vunpack.c.l.b16 %v501
    %v932 = vunpack.c.l.b16 %v502
    %v933 = vunpack.c.h.b16 %v502
    %v934 = vunpack.c.l.b16 %v503
    %v935 = vunpack.c.l.b16 %v504
    %v936 = vunpack.c.h.b16 %v504
    %v937 = vunpack.c.l.b16 %v505
    %v938 = vunpack.c.l.b16 %v506
    %v939 = vunpack.c.h.b16 %v506
    %v940 = vunpack.c.l.b16 %v507
    %v941 = vpack.c.b16 %v752, %v749
    %v942 = vpack.c.b16 %v753, %v750
    %v943 = vpack.c.b16 %v754, %v751
    %v944 = vpack.c.b16 %v758, %v755
    %v945 = vpack.c.b16 %v759, %v756
    %v946 = vpack.c.b16 %v760, %v757
    %v947 = vpack.c.b16 %v764, %v761
    %v948 = vpack.c.b16 %v765, %v762
    %v949 = vpack.c.b16 %v766, %v763
    %v950 = vpack.c.b16 %v770, %v767
    %v951 = vpack.c.b16 %v771, %v768
    %v952 = vpack.c.b16 %v772, %v769
    %v953 = vpack.c.b16 %v776, %v773
    %v954 = vpack.c.b16 %v777, %v774
    %v955 = vpack.c.b16 %v778, %v775
    %v956 = vpack.c.b16 %v782, %v779
    %v957 = vpack.c.b16 %v783, %v780
    %v958 = vpack.c.b16 %v784, %v781
    %v959 = vpack.c.b16 %v788, %v785
    %v960 = vpack.c.b16 %v789, %v786
    %v961 = vpack.c.b16 %v790, %v787
    %v962 = vpack.c.b16 %v794, %v791
    %v963 = vpack.c.b16 %v795, %v792
    %v964 = vpack.c.b16 %v796, %v793
    %v965 = vpack.c.b16 %v800, %v797
    %v966 = vpack.c.b16 %v801, %v798
    %v967 = vpack.c.b16 %v802, %v799
    %v968 = vpack.c.b16 %v806, %v803
    %v969 = vpack.c.b16 %v807, %v804
    %v970 = vpack.c.b16 %v808, %v805
    %v971 = vpack.c.b16 %v812, %v809
    %v972 = vpack.c.b16 %v813, %v810
    %v973 = vpack.c.b16 %v814, %v811
    %v974 = vpack.c.b16 %v818, %v815
    %v975 = vpack.c.b16 %v819, %v816
    %v976 = vpack.c.b16 %v820, %v817
    %v977 = vpack.c.b16 %v824, %v821
    %v978 = vpack.c.b16 %v825, %v822
    %v979 = vpack.c.b16 %v826, %v823
    %v980 = vpack.c.b16 %v830, %v827
    %v981 = vpack.c.b16 %v831, %v828
    %v982 = vpack.c.b16 %v832, %v829
    %v983 = vpack.c.b16 %v836, %v833
    %v984 = vpack.c.b16 %v837, %v834
    %v985 = vpack.c.b16 %v838, %v835
    %v986 = vpack.c.b16 %v842, %v839
    %v987 = vpack.c.b16 %v843, %v840
    %v988 = vpack.c.b16 %v844, %v841
    %v989 = vpack.c.b16 %v848, %v845
    %v990 = vpack.c.b16 %v849, %v846
    %v991 = vpack.c.b16 %v850, %v847
    %v992 = vpack.c.b16 %v854, %v851
    %v993 = vpack.c.b16 %v855, %v852
    %v994 = vpack.c.b16 %v856, %v853
    %v995 = vpack.c.b16 %v860, %v857
    %v996 = vpack.c.b16 %v861, %v858
    %v997 = vpack.c.b16 %v862, %v859
    %v998 = vpack.c.b16 %v866, %v863
    %v999 = vpack.c.b16 %v867, %v864
    %v1000 = vpack.c.b16 %v868, %v865
    %v1001 = vpack.c.b16 %v872, %v869
    %v1002 = vpack.c.b16 %v873, %v870
    %v1003 = vpack.c.b16 %v874, %v871
    %v1004 = vpack.c.b16 %v878, %v875
    %v1005 = vpack.c.b16 %v879, %v876
    %v1006 = vpack.c.b16 %v880, %v877
    %v1007 = vpack.c.b16 %v884, %v881
    %v1008 = vpack.c.b16 %v885, %v882
    %v1009 = vpack.c.b16 %v886, %v883
    %v1010 = vpack.c.b16 %v890, %v887
    %v1011 = vpack.c.b16 %v891, %v888
    %v1012 = vpack.c.b16 %v892, %v889
    %v1013 = vpack.c.b16 %v896, %v893
    %v1014 = vpack.c.b16 %v897, %v894
    %v1015 = vpack.c.b16 %v898, %v895
    %v1016 = vpack.c.b16 %v902, %v899
    %v1017 = vpack.c.b16 %v903, %v900
    %v1018 = vpack.c.b16 %v904, %v901
    %v1019 = vpack.c.b16 %v908, %v905
    %v1020 = vpack.c.b16 %v909, %v906
    %v1021 = vpack.c.b16 %v910, %v907
    %v1022 = vpack.c.b16 %v914, %v911
    %v1023 = vpack.c.b16 %v915, %v912
    %v1024 = vpack.c.b16 %v916, %v913
    %v1025 = vpack.c.b16 %v920, %v917
    %v1026 = vpack.c.b16 %v921, %v918
    %v1027 = vpack.c.b16 %v922, %v919
    %v1028 = vpack.c.b16 %v926, %v923
    %v1029 = vpack.c.b16 %v927, %v924
    %v1030 = vpack.c.b16 %v928, %v925
    %v1031 = vpack.c.b16 %v932, %v929
    %v1032 = vpack.c.b16 %v933, %v930
    %v1033 = vpack.c.b16 %v934, %v931
    %v1034 = vpack.c.b16 %v938, %v935
    %v1035 = vpack.c.b16 %v939, %v936
    %v1036 = vpack.c.b16 %v940, %v937
    %1133 = vmatprep.subr.bf16.mxu0 %v942
    %1134 = vmatpush1.bf16.msra.mxu0 %v941
    %1135 = vmatprep.subr.bf16.mxu0 %v945
    %1136 = vmatpush1.bf16.msra.mxu0 %v944
    %1137 = vmatprep.subr.bf16.mxu0 %v948
    %1138 = vmatpush1.bf16.msra.mxu0 %v947
    %1139 = vmatprep.subr.bf16.mxu0 %v951
    %1140 = vmatpush1.bf16.msra.mxu0 %v950
    %1141 = vmatprep.subr.bf16.mxu0 %v954
    %1142 = vmatpush1.bf16.msra.mxu0 %v953
    %1143 = vmatprep.subr.bf16.mxu0 %v957
    %1144 = vmatpush1.bf16.msra.mxu0 %v956
    %1145 = vmatprep.subr.bf16.mxu0 %v960
    %1146 = vmatpush1.bf16.msra.mxu0 %v959
    %1147 = vmatprep.subr.bf16.mxu0 %v963
    %1148 = vmatpush1.bf16.msra.mxu0 %v962
    %1149 = vmatprep.subr.bf16.mxu0 %v966
    %1150 = vmatpush1.bf16.msra.mxu0 %v965
    %1151 = vmatprep.subr.bf16.mxu0 %v969
    %1152 = vmatpush1.bf16.msra.mxu0 %v968
    %1153 = vmatprep.subr.bf16.mxu0 %v972
    %1154 = vmatpush1.bf16.msra.mxu0 %v971
    %1155 = vmatprep.subr.bf16.mxu0 %v975
    %1156 = vmatpush1.bf16.msra.mxu0 %v974
    %1157 = vmatprep.subr.bf16.mxu0 %v978
    %1158 = vmatpush1.bf16.msra.mxu0 %v977
    %1159 = vmatprep.subr.bf16.mxu0 %v981
    %1160 = vmatpush1.bf16.msra.mxu0 %v980
    %1161 = vmatprep.subr.bf16.mxu0 %v984
    %1162 = vmatpush1.bf16.msra.mxu0 %v983
    %1163 = vmatprep.subr.bf16.mxu0 %v987
    %1164 = vmatpush1.bf16.msra.mxu0 %v986
    %1165 = vmatprep.mubr.bf16.mxu0 %v377
    %1166 = vmatmul.mubr.bf16.gmra.mrb[0].mxu0 %v376
    %v1167 = vpop.f32.mrb[0].mxu0
    %v1168 = vadd.f32 %v575, %v1167
    %v1169 = vpop.f32.mrb[0].mxu0
    %v1170 = vadd.f32 %v577, %v1169
    %v1171 = vpop.f32.mrb[0].mxu0
    %v1172 = vpop.f32.mrb[0].mxu0
    %1173 = vdwg.mxu0
    %1174 = vmatprep.subr.bf16.mxu0 %v990
    %1175 = vmatpush1.bf16.msra.mxu0 %v989
    %1176 = vmatprep.subr.bf16.mxu0 %v993
    %1177 = vmatpush1.bf16.msra.mxu0 %v992
    %1178 = vmatprep.subr.bf16.mxu0 %v996
    %1179 = vmatpush1.bf16.msra.mxu0 %v995
    %1180 = vmatprep.subr.bf16.mxu0 %v999
    %1181 = vmatpush1.bf16.msra.mxu0 %v998
    %1182 = vmatprep.subr.bf16.mxu0 %v1002
    %1183 = vmatpush1.bf16.msra.mxu0 %v1001
    %1184 = vmatprep.subr.bf16.mxu0 %v1005
    %1185 = vmatpush1.bf16.msra.mxu0 %v1004
    %1186 = vmatprep.subr.bf16.mxu0 %v1008
    %1187 = vmatpush1.bf16.msra.mxu0 %v1007
    %1188 = vmatprep.subr.bf16.mxu0 %v1011
    %1189 = vmatpush1.bf16.msra.mxu0 %v1010
    %1190 = vmatprep.subr.bf16.mxu0 %v1014
    %1191 = vmatpush1.bf16.msra.mxu0 %v1013
    %1192 = vmatprep.subr.bf16.mxu0 %v1017
    %1193 = vmatpush1.bf16.msra.mxu0 %v1016
    %1194 = vmatprep.subr.bf16.mxu0 %v1020
    %1195 = vmatpush1.bf16.msra.mxu0 %v1019
    %1196 = vmatprep.subr.bf16.mxu0 %v1023
    %1197 = vmatpush1.bf16.msra.mxu0 %v1022
    %1198 = vmatprep.subr.bf16.mxu0 %v1026
    %1199 = vmatpush1.bf16.msra.mxu0 %v1025
    %1200 = vmatprep.subr.bf16.mxu0 %v1029
    %1201 = vmatpush1.bf16.msra.mxu0 %v1028
    %1202 = vmatprep.subr.bf16.mxu0 %v1032
    %1203 = vmatpush1.bf16.msra.mxu0 %v1031
    %1204 = vmatprep.subr.bf16.mxu0 %v1035
    %1205 = vmatpush1.bf16.msra.mxu0 %v1034
    %1206 = vmatprep.mubr.bf16.mxu0 %v379
    %1207 = vmatmul.mubr.bf16.gmra.mrb[0].mxu0 %v378
    %v1208 = vpop.f32.mrb[0].mxu0
    %v1209 = vadd.f32 %v1168, %v1208
    %v1210 = vpop.f32.mrb[0].mxu0
    %v1211 = vadd.f32 %v1170, %v1210
    %v1212 = vpop.f32.mrb[0].mxu0
    %v1213 = vpop.f32.mrb[0].mxu0
    %1214 = vdwg.mxu0
    %1215 = vmatprep.subr.bf16.mxu0 0
    %1216 = vmatpush1.bf16.msra.mxu0 %v943
    %1217 = vmatprep.subr.bf16.mxu0 0
    %1218 = vmatpush1.bf16.msra.mxu0 %v946
    %1219 = vmatprep.subr.bf16.mxu0 0
    %1220 = vmatpush1.bf16.msra.mxu0 %v949
    %1221 = vmatprep.subr.bf16.mxu0 0
    %1222 = vmatpush1.bf16.msra.mxu0 %v952
    %1223 = vmatprep.subr.bf16.mxu0 0
    %1224 = vmatpush1.bf16.msra.mxu0 %v955
    %1225 = vmatprep.subr.bf16.mxu0 0
    %1226 = vmatpush1.bf16.msra.mxu0 %v958
    %1227 = vmatprep.subr.bf16.mxu0 0
    %1228 = vmatpush1.bf16.msra.mxu0 %v961
    %1229 = vmatprep.subr.bf16.mxu0 0
    %1230 = vmatpush1.bf16.msra.mxu0 %v964
    %1231 = vmatprep.subr.bf16.mxu0 0
    %1232 = vmatpush1.bf16.msra.mxu0 %v967
    %1233 = vmatprep.subr.bf16.mxu0 0
    %1234 = vmatpush1.bf16.msra.mxu0 %v970
    %1235 = vmatprep.subr.bf16.mxu0 0
    %1236 = vmatpush1.bf16.msra.mxu0 %v973
    %1237 = vmatprep.subr.bf16.mxu0 0
    %1238 = vmatpush1.bf16.msra.mxu0 %v976
    %1239 = vmatprep.subr.bf16.mxu0 0
    %1240 = vmatpush1.bf16.msra.mxu0 %v979
    %1241 = vmatprep.subr.bf16.mxu0 0
    %1242 = vmatpush1.bf16.msra.mxu0 %v982
    %1243 = vmatprep.subr.bf16.mxu0 0
    %1244 = vmatpush1.bf16.msra.mxu0 %v985
    %1245 = vmatprep.subr.bf16.mxu0 0
    %1246 = vmatpush1.bf16.msra.mxu0 %v988
    %1247 = vmatprep.mubr.bf16.mxu0 %v377
    %1248 = vmatmul.mubr.bf16.gmra.mrb[0].mxu0 %v376
    %v1249 = vpop.f32.mrb[0].mxu0
    %v1250 = vadd.f32 %v616, %v1249
    %v1251 = vpop.f32.mrb[0].mxu0
    %v1252 = vpop.f32.mrb[0].mxu0
    %v1253 = vpop.f32.mrb[0].mxu0
    %1254 = vdwg.mxu0
    %1255 = vmatprep.subr.bf16.mxu0 0
    %1256 = vmatpush1.bf16.msra.mxu0 %v991
    %1257 = vmatprep.subr.bf16.mxu0 0
    %1258 = vmatpush1.bf16.msra.mxu0 %v994
    %1259 = vmatprep.subr.bf16.mxu0 0
    %1260 = vmatpush1.bf16.msra.mxu0 %v997
    %1261 = vmatprep.subr.bf16.mxu0 0
    %1262 = vmatpush1.bf16.msra.mxu0 %v1000
    %1263 = vmatprep.subr.bf16.mxu0 0
    %1264 = vmatpush1.bf16.msra.mxu0 %v1003
    %1265 = vmatprep.subr.bf16.mxu0 0
    %1266 = vmatpush1.bf16.msra.mxu0 %v1006
    %1267 = vmatprep.subr.bf16.mxu0 0
    %1268 = vmatpush1.bf16.msra.mxu0 %v1009
    %1269 = vmatprep.subr.bf16.mxu0 0
    %1270 = vmatpush1.bf16.msra.mxu0 %v1012
    %1271 = vmatprep.subr.bf16.mxu0 0
    %1272 = vmatpush1.bf16.msra.mxu0 %v1015
    %1273 = vmatprep.subr.bf16.mxu0 0
    %1274 = vmatpush1.bf16.msra.mxu0 %v1018
    %1275 = vmatprep.subr.bf16.mxu0 0
    %1276 = vmatpush1.bf16.msra.mxu0 %v1021
    %1277 = vmatprep.subr.bf16.mxu0 0
    %1278 = vmatpush1.bf16.msra.mxu0 %v1024
    %1279 = vmatprep.subr.bf16.mxu0 0
    %1280 = vmatpush1.bf16.msra.mxu0 %v1027
    %1281 = vmatprep.subr.bf16.mxu0 0
    %1282 = vmatpush1.bf16.msra.mxu0 %v1030
    %1283 = vmatprep.subr.bf16.mxu0 0
    %1284 = vmatpush1.bf16.msra.mxu0 %v1033
    %1285 = vmatprep.subr.bf16.mxu0 0
    %1286 = vmatpush1.bf16.msra.mxu0 %v1036
    %1287 = vmatprep.mubr.bf16.mxu0 %v379
    %1288 = vmatmul.mubr.bf16.gmra.mrb[0].mxu0 %v378
    %v1289 = vpop.f32.mrb[0].mxu0
    %v1290 = vadd.f32 %v1250, %v1289
    %v1291 = vpop.f32.mrb[0].mxu0
    %v1292 = vpop.f32.mrb[0].mxu0
    %v1293 = vpop.f32.mrb[0].mxu0
    %1294 = vdwg.mxu0
    %v1296 = vlaneseq
    %v1297 = vshrl.u32 %v1296, 7
    %v1298 = vsub.s32 0, %v1297
    %v1299 = vrot.slane %v71, %v1298
    %v1300 = vlaneseq
    %v1301 = vshrl.u32 %v1300, 7
    %v1302 = vsub.s32 1, %v1301
    %v1303 = vrot.slane %v71, %v1302
    %v1304 = vlaneseq
    %v1305 = vshrl.u32 %v1304, 7
    %v1306 = vsub.s32 2, %v1305
    %v1307 = vrot.slane %v71, %v1306
    %v1311 = vadd.f32 %v1209, %v1299
    %v1312 = vadd.f32 %v1211, %v1303
    %v1313 = vadd.f32 %v1290, %v1307
    %v1314 = vmax.f32 %v1311, 0.0
    %v1315 = vmax.f32 %v1312, 0.0
    %v1316 = vmax.f32 %v1313, 0.0
    %v1318 = vlaneseq
    %v1319 = vshrl.u32 %v1318, 7
    %v1320 = vsub.s32 0, %v1319
    %v1321 = vrot.slane %v73, %v1320
    %v1322 = vlaneseq
    %v1323 = vshrl.u32 %v1322, 7
    %v1324 = vsub.s32 1, %v1323
    %v1325 = vrot.slane %v73, %v1324
    %v1326 = vlaneseq
    %v1327 = vshrl.u32 %v1326, 7
    %v1328 = vsub.s32 2, %v1327
    %v1329 = vrot.slane %v73, %v1328
    %v1333 = vmul.f32 %v1314, %v1321
    %v1334 = vmul.f32 %v1315, %v1325
    %v1335 = vmul.f32 %v1316, %v1329
    %v1336 = vadd.f32 %v1333, %v1334
    %v1337 = vadd.f32 %v1336, %v1335
    %1338 = vadd.xlane.f32.xlu0 %v1337
    %v1339 = vpop.xlane.xlu0 %1338
    %v1340 = vadd.f32 %v1339, %v74
    %vm1341 = vcmask 7168
    %1342 = vst.msk [vmem:[%s6] sm:$0xff] %vm1341, %v1340
    // Predicated region
    $region38: #{tpu_custom_call.1} parent=1 // pred_check
      _
    $region39: #{tpu_custom_call.1} parent=1 // pred_check_branch
      %1344 = sbr.rel (0) target = $region41
    $region40: #{tpu_custom_call.1} parent=1 // pred_region
      _
    $region41: #{tpu_custom_call.1} parent=1 // pred_fallthru
      _
    // Predicated region
    $region42: #{tpu_custom_call.1} parent=1 // pred_check
      _
    $region43: #{tpu_custom_call.1} parent=1 // pred_check_branch
      %1346 = sbr.rel (0) target = $region45
    $region44: #{tpu_custom_call.1} parent=1 // pred_region
      _
    $region45: #{tpu_custom_call.1} parent=1 // pred_fallthru
      _
    %1347 = vsyncpa [#allocation3], 1
    %1348 = vsyncpa [#allocation5], 1

</llo_original>
